<compile_context>
chip_gen: v7x
topology: tpu7x:2x2x1
jax: 0.10.0
libtpu: 0.0.40
codegen_flags: <defaults>
</compile_context>

<pallas_src>
import jax
import jax.numpy as jnp
import numpy as np
from jax.experimental import pallas as pl
from jax.experimental.pallas import tpu as pltpu


# ----------------------------------------------------------------------------------
# Fused VisualNet head kernel.  grid = (B // bt,), one tile of `bt` batch elems / step.
# ----------------------------------------------------------------------------------
def visual_head_kernel(img_ref, pos_ref, neg_ref, w_ref, b_ref, cu_ref, ci_ref,
                       pm_ref, nm_ref, fp_ref, fn_ref):
    # img_ref : (bt, V, P, F)  VGG features for bt batch elements
    # pos_ref : (V, F)         pos_v_emb   (grid-invariant)
    # neg_ref : (V, F)         neg_v_emb   (grid-invariant)
    # w_ref   : (1, F)         linear weight (out_features = 1)
    # b_ref   : (1, 1)         linear bias
    # cu_ref  : (bt, 1, 1)     c_u for this tile
    # ci_ref  : (bt, 1, 1)     c_i for this tile
    # outputs : (bt, V, 1)     pos_match / neg_match / final_pos / final_neg
    img = img_ref[...].astype(jnp.float32)                       # (bt, V, P, F)
    inv_p = jnp.float32(1.0 / img.shape[2])
    mean_repr = jnp.sum(img, axis=2) * inv_p                     # (bt, V, F) photo mean

    w = w_ref[...].astype(jnp.float32)                           # (1, F)
    bias = b_ref[0, 0]
    w3 = w.reshape(1, 1, w.shape[-1])                            # (1, 1, F)

    # Linear(F -> 1): broadcast-multiply + lane reduction (hidden under input DMA).
    img_emb = jnp.sum(mean_repr * w3, axis=-1, keepdims=True) + bias          # (bt, V, 1)
    pos_emb = jnp.sum(pos_ref[...].astype(jnp.float32) * w,
                      axis=-1, keepdims=True) + bias                          # (V, 1)
    neg_emb = jnp.sum(neg_ref[...].astype(jnp.float32) * w,
                      axis=-1, keepdims=True) + bias                          # (V, 1)

    pos_match = jnp.tanh(jnp.abs(pos_emb[None] - img_emb))                    # (bt, V, 1)
    neg_match = jnp.tanh(jnp.abs(neg_emb[None] - img_emb))                    # (bt, V, 1)

    scale = cu_ref[...] * ci_ref[...]                                         # (bt, 1, 1)

    pm_ref[...] = pos_match
    nm_ref[...] = neg_match
    fp_ref[...] = scale * (1.0 - pos_match)
    fn_ref[...] = scale * (1.0 - neg_match)


def visual_net_forward(img_repr, pos_v_emb, neg_v_emb, lin_w, lin_b, c_u, c_i,
                       *, block_bytes_budget=4 * 1024 * 1024):
    """img_repr: (B, V, P, F) VGG features.  c_u, c_i: (B, 1) confidence scalars."""
    B, V, P, F = img_repr.shape

    # Largest batch tile (dividing B) whose img block fits the VMEM budget
    # (double-buffered by Pallas, so keep per-block <= 4 MiB).
    per_elem_bytes = V * P * F * img_repr.dtype.itemsize
    bt = 1
    for d in range(1, B + 1):
        if B % d == 0 and d * per_elem_bytes <= block_bytes_budget:
            bt = d
    grid = (B // bt,)

    w2 = lin_w.reshape(1, F).astype(jnp.float32)
    b2 = lin_b.reshape(1, 1).astype(jnp.float32)
    cu3 = c_u.reshape(B, 1, 1).astype(jnp.float32)
    ci3 = c_i.reshape(B, 1, 1).astype(jnp.float32)

    out_shapes = tuple(jax.ShapeDtypeStruct((B, V, 1), jnp.float32) for _ in range(4))
    out_specs = tuple(pl.BlockSpec((bt, V, 1), lambda i: (i, 0, 0)) for _ in range(4))

    pm, nm, fp, fn = pl.pallas_call(
        visual_head_kernel,
        out_shape=out_shapes,
        grid=grid,
        in_specs=[
            pl.BlockSpec((bt, V, P, F), lambda i: (i, 0, 0, 0)),   # img_repr tile
            pl.BlockSpec((V, F), lambda i: (0, 0)),                # pos_v_emb (invariant)
            pl.BlockSpec((V, F), lambda i: (0, 0)),                # neg_v_emb (invariant)
            pl.BlockSpec((1, F), lambda i: (0, 0)),                # linear weight
            pl.BlockSpec((1, 1), lambda i: (0, 0)),                # linear bias
            pl.BlockSpec((bt, 1, 1), lambda i: (i, 0, 0)),         # c_u tile
            pl.BlockSpec((bt, 1, 1), lambda i: (i, 0, 0)),         # c_i tile
        ],
        out_specs=out_specs,
        compiler_params=pltpu.CompilerParams(dimension_semantics=("parallel",)),
    )(img_repr, pos_v_emb, neg_v_emb, w2, b2, cu3, ci3)

    return pm[..., 0], nm[..., 0], fp[..., 0], fn[..., 0]


# ----------------------------------------------------------------------------------
# Pure-JAX reference (mirrors the PyTorch math) for a correctness check.
# ----------------------------------------------------------------------------------
def ref_forward(img_repr, pos_v_emb, neg_v_emb, lin_w, lin_b, c_u, c_i):
    with jax.default_matmul_precision("float32"):
        mean_repr = img_repr.mean(axis=-2)                         # (B, V, F)
        img_emb = (mean_repr @ lin_w.T + lin_b)[..., 0]            # (B, V)
        pos_emb = (pos_v_emb @ lin_w.T + lin_b)[..., 0]            # (V,)
        neg_emb = (neg_v_emb @ lin_w.T + lin_b)[..., 0]            # (V,)
        pos_match = jnp.tanh(jnp.abs(pos_emb - img_emb))           # (B, V)
        neg_match = jnp.tanh(jnp.abs(neg_emb - img_emb))           # (B, V)
        final_pos = c_u * c_i * (1.0 - pos_match)                  # (B, V)
        final_neg = c_u * c_i * (1.0 - neg_match)                  # (B, V)
        return pos_match, neg_match, final_pos, final_neg


if __name__ == "__main__":
    # Small deterministic shapes: batch=2, view_size=4, photo_count=3, vgg_out=256.
    B, V, P, F = 2, 4, 3, 256

    key = jax.random.PRNGKey(0)
    k = jax.random.split(key, 7)
    img_repr = jax.random.normal(k[0], (B, V, P, F), jnp.float32)
    pos_v_emb = jax.random.normal(k[1], (V, F), jnp.float32)
    neg_v_emb = jax.random.normal(k[2], (V, F), jnp.float32)
    lin_w = jax.random.normal(k[3], (1, F), jnp.float32) * (1.0 / (F ** 0.5))
    lin_b = jax.random.normal(k[4], (1,), jnp.float32)
    c_u = jax.random.uniform(k[5], (B, 1), jnp.float32)             # per-example confidences
    c_i = jax.random.uniform(k[6], (B, 1), jnp.float32)

    outs = visual_net_forward(img_repr, pos_v_emb, neg_v_emb, lin_w, lin_b, c_u, c_i)
    outs = jax.block_until_ready(outs)

    refs = jax.block_until_ready(
        ref_forward(img_repr, pos_v_emb, neg_v_emb, lin_w, lin_b, c_u, c_i))

    for got, want in zip(outs, refs):
        np.testing.assert_allclose(np.asarray(got), np.asarray(want),
                                   atol=1e-4, rtol=1e-4)

    print("KERNEL_OK")
</pallas_src>

<mosaic_0001>
module attributes {stable_mosaic.version = 11 : i64} {
  func.func @visual_head_kernel(%arg0: i32, %arg1: memref<2x4x3x256xf32, #tpu.memory_space<vmem>>, %arg2: memref<4x256xf32, #tpu.memory_space<vmem>>, %arg3: memref<4x256xf32, #tpu.memory_space<vmem>>, %arg4: memref<1x256xf32, #tpu.memory_space<vmem>>, %arg5: memref<1x1xf32, #tpu.memory_space<vmem>>, %arg6: memref<2x1x1xf32, #tpu.memory_space<vmem>>, %arg7: memref<2x1x1xf32, #tpu.memory_space<vmem>>, %arg8: memref<2x4x1xf32, #tpu.memory_space<vmem>>, %arg9: memref<2x4x1xf32, #tpu.memory_space<vmem>>, %arg10: memref<2x4x1xf32, #tpu.memory_space<vmem>>, %arg11: memref<2x4x1xf32, #tpu.memory_space<vmem>>) attributes {dimension_semantics = [#tpu.dimension_semantics<parallel>], iteration_bounds = array<i64: 1>, scalar_prefetch = 0 : i64, scratch_operands = 0 : i64, tpu.core_type = #tpu.core_type<tc>, window_params = [{transform_indices = @transform_0, window_bounds = array<i64: 2, 4, 3, 256>}, {pipeline_mode = #tpu.pipeline_mode<synchronous>, transform_indices = @transform_1, window_bounds = array<i64: 4, 256>}, {pipeline_mode = #tpu.pipeline_mode<synchronous>, transform_indices = @transform_2, window_bounds = array<i64: 4, 256>}, {pipeline_mode = #tpu.pipeline_mode<synchronous>, transform_indices = @transform_3, window_bounds = array<i64: 1, 256>}, {pipeline_mode = #tpu.pipeline_mode<synchronous>, transform_indices = @transform_4, window_bounds = array<i64: 1, 1>}, {transform_indices = @transform_5, window_bounds = array<i64: 2, 1, 1>}, {transform_indices = @transform_6, window_bounds = array<i64: 2, 1, 1>}, {transform_indices = @transform_7, window_bounds = array<i64: 2, 4, 1>}, {transform_indices = @transform_8, window_bounds = array<i64: 2, 4, 1>}, {transform_indices = @transform_9, window_bounds = array<i64: 2, 4, 1>}, {transform_indices = @transform_10, window_bounds = array<i64: 2, 4, 1>}]} {
    %c0 = arith.constant 0 : index
    %c0_0 = arith.constant 0 : index
    %c0_1 = arith.constant 0 : index
    %c0_2 = arith.constant 0 : index
    %0 = vector.load %arg1[%c0, %c0_0, %c0_1, %c0_2] : memref<2x4x3x256xf32, #tpu.memory_space<vmem>>, vector<2x4x3x256xf32>
    %cst = arith.constant dense<0.000000e+00> : vector<2x4x256xf32>
    %1 = vector.multi_reduction <add>, %0, %cst [2] : vector<2x4x3x256xf32> to vector<2x4x256xf32>
    %cst_3 = arith.constant 0.333333343 : f32
    %2 = vector.broadcast %cst_3 : f32 to vector<2x4x256xf32>
    %3 = arith.mulf %1, %2 : vector<2x4x256xf32>
    %c0_4 = arith.constant 0 : index
    %c0_5 = arith.constant 0 : index
    %4 = vector.load %arg4[%c0_4, %c0_5] : memref<1x256xf32, #tpu.memory_space<vmem>>, vector<1x256xf32>
    %c0_6 = arith.constant 0 : index
    %c0_7 = arith.constant 0 : index
    %5 = vector.load %arg5[%c0_6, %c0_7] : memref<1x1xf32, #tpu.memory_space<vmem>>, vector<1x1xf32>
    %6 = vector.extract %5[0, 0] : f32 from vector<1x1xf32>
    %7 = vector.shape_cast %4 : vector<1x256xf32> to vector<1x1x256xf32>
    %8 = vector.broadcast %7 : vector<1x1x256xf32> to vector<2x4x256xf32>
    %9 = arith.mulf %3, %8 : vector<2x4x256xf32>
    %cst_8 = arith.constant dense<0.000000e+00> : vector<2x4xf32>
    %10 = vector.multi_reduction <add>, %9, %cst_8 [2] : vector<2x4x256xf32> to vector<2x4xf32>
    %11 = vector.shape_cast %10 : vector<2x4xf32> to vector<2x4x1xf32>
    %12 = vector.broadcast %6 : f32 to vector<2x4x1xf32>
    %13 = arith.addf %11, %12 : vector<2x4x1xf32>
    %c0_9 = arith.constant 0 : index
    %c0_10 = arith.constant 0 : index
    %14 = vector.load %arg2[%c0_9, %c0_10] : memref<4x256xf32, #tpu.memory_space<vmem>>, vector<4x256xf32>
    %15 = vector.broadcast %4 : vector<1x256xf32> to vector<4x256xf32>
    %16 = arith.mulf %14, %15 : vector<4x256xf32>
    %cst_11 = arith.constant dense<0.000000e+00> : vector<4xf32>
    %17 = vector.multi_reduction <add>, %16, %cst_11 [1] : vector<4x256xf32> to vector<4xf32>
    %18 = vector.shape_cast %17 : vector<4xf32> to vector<4x1xf32>
    %19 = vector.broadcast %6 : f32 to vector<4x1xf32>
    %20 = arith.addf %18, %19 : vector<4x1xf32>
    %c0_12 = arith.constant 0 : index
    %c0_13 = arith.constant 0 : index
    %21 = vector.load %arg3[%c0_12, %c0_13] : memref<4x256xf32, #tpu.memory_space<vmem>>, vector<4x256xf32>
    %22 = vector.broadcast %4 : vector<1x256xf32> to vector<4x256xf32>
    %23 = arith.mulf %21, %22 : vector<4x256xf32>
    %cst_14 = arith.constant dense<0.000000e+00> : vector<4xf32>
    %24 = vector.multi_reduction <add>, %23, %cst_14 [1] : vector<4x256xf32> to vector<4xf32>
    %25 = vector.shape_cast %24 : vector<4xf32> to vector<4x1xf32>
    %26 = vector.broadcast %6 : f32 to vector<4x1xf32>
    %27 = arith.addf %25, %26 : vector<4x1xf32>
    %28 = vector.shape_cast %20 : vector<4x1xf32> to vector<1x4x1xf32>
    %29 = vector.broadcast %28 : vector<1x4x1xf32> to vector<2x4x1xf32>
    %30 = arith.subf %29, %13 : vector<2x4x1xf32>
    %31 = math.absf %30 : vector<2x4x1xf32>
    %32 = math.tanh %31 : vector<2x4x1xf32>
    %33 = vector.shape_cast %27 : vector<4x1xf32> to vector<1x4x1xf32>
    %34 = vector.broadcast %33 : vector<1x4x1xf32> to vector<2x4x1xf32>
    %35 = arith.subf %34, %13 : vector<2x4x1xf32>
    %36 = math.absf %35 : vector<2x4x1xf32>
    %37 = math.tanh %36 : vector<2x4x1xf32>
    %c0_15 = arith.constant 0 : index
    %c0_16 = arith.constant 0 : index
    %c0_17 = arith.constant 0 : index
    %38 = vector.load %arg6[%c0_15, %c0_16, %c0_17] : memref<2x1x1xf32, #tpu.memory_space<vmem>>, vector<2x1x1xf32>
    %c0_18 = arith.constant 0 : index
    %c0_19 = arith.constant 0 : index
    %c0_20 = arith.constant 0 : index
    %39 = vector.load %arg7[%c0_18, %c0_19, %c0_20] : memref<2x1x1xf32, #tpu.memory_space<vmem>>, vector<2x1x1xf32>
    %40 = arith.mulf %38, %39 : vector<2x1x1xf32>
    %c0_21 = arith.constant 0 : index
    %c0_22 = arith.constant 0 : index
    %c0_23 = arith.constant 0 : index
    %41 = vector.load %arg8[%c0_21, %c0_22, %c0_23] : memref<2x4x1xf32, #tpu.memory_space<vmem>>, vector<2x4x1xf32>
    tpu.vector_store %arg8[%c0_21, %c0_22, %c0_23], %32 {strides = array<i32>} : memref<2x4x1xf32, #tpu.memory_space<vmem>>, vector<2x4x1xf32>,
    %c0_24 = arith.constant 0 : index
    %c0_25 = arith.constant 0 : index
    %c0_26 = arith.constant 0 : index
    %42 = vector.load %arg9[%c0_24, %c0_25, %c0_26] : memref<2x4x1xf32, #tpu.memory_space<vmem>>, vector<2x4x1xf32>
    tpu.vector_store %arg9[%c0_24, %c0_25, %c0_26], %37 {strides = array<i32>} : memref<2x4x1xf32, #tpu.memory_space<vmem>>, vector<2x4x1xf32>,
    %cst_27 = arith.constant 1.000000e+00 : f32
    %43 = vector.broadcast %cst_27 : f32 to vector<2x4x1xf32>
    %44 = arith.subf %43, %32 : vector<2x4x1xf32>
    %45 = vector.broadcast %40 : vector<2x1x1xf32> to vector<2x4x1xf32>
    %46 = arith.mulf %45, %44 : vector<2x4x1xf32>
    %c0_28 = arith.constant 0 : index
    %c0_29 = arith.constant 0 : index
    %c0_30 = arith.constant 0 : index
    %47 = vector.load %arg10[%c0_28, %c0_29, %c0_30] : memref<2x4x1xf32, #tpu.memory_space<vmem>>, vector<2x4x1xf32>
    tpu.vector_store %arg10[%c0_28, %c0_29, %c0_30], %46 {strides = array<i32>} : memref<2x4x1xf32, #tpu.memory_space<vmem>>, vector<2x4x1xf32>,
    %cst_31 = arith.constant 1.000000e+00 : f32
    %48 = vector.broadcast %cst_31 : f32 to vector<2x4x1xf32>
    %49 = arith.subf %48, %37 : vector<2x4x1xf32>
    %50 = vector.broadcast %40 : vector<2x1x1xf32> to vector<2x4x1xf32>
    %51 = arith.mulf %50, %49 : vector<2x4x1xf32>
    %c0_32 = arith.constant 0 : index
    %c0_33 = arith.constant 0 : index
    %c0_34 = arith.constant 0 : index
    %52 = vector.load %arg11[%c0_32, %c0_33, %c0_34] : memref<2x4x1xf32, #tpu.memory_space<vmem>>, vector<2x4x1xf32>
    tpu.vector_store %arg11[%c0_32, %c0_33, %c0_34], %51 {strides = array<i32>} : memref<2x4x1xf32, #tpu.memory_space<vmem>>, vector<2x4x1xf32>,
    return
  }
  func.func @transform_0(%arg0: i32) -> (i32, i32, i32, i32) {
    %c0_i32 = arith.constant 0 : i32
    %c0_i32_0 = arith.constant 0 : i32
    %c0_i32_1 = arith.constant 0 : i32
    %c0_i32_2 = arith.constant 0 : i32
    return %arg0, %c0_i32, %c0_i32_0, %c0_i32_1 : i32, i32, i32, i32
  }
  func.func @transform_1(%arg0: i32) -> (i32, i32) {
    %c0_i32 = arith.constant 0 : i32
    %c0_i32_0 = arith.constant 0 : i32
    %c0_i32_1 = arith.constant 0 : i32
    return %c0_i32, %c0_i32_0 : i32, i32
  }
  func.func @transform_2(%arg0: i32) -> (i32, i32) {
    %c0_i32 = arith.constant 0 : i32
    %c0_i32_0 = arith.constant 0 : i32
    %c0_i32_1 = arith.constant 0 : i32
    return %c0_i32, %c0_i32_0 : i32, i32
  }
  func.func @transform_3(%arg0: i32) -> (i32, i32) {
    %c0_i32 = arith.constant 0 : i32
    %c0_i32_0 = arith.constant 0 : i32
    %c0_i32_1 = arith.constant 0 : i32
    return %c0_i32, %c0_i32_0 : i32, i32
  }
  func.func @transform_4(%arg0: i32) -> (i32, i32) {
    %c0_i32 = arith.constant 0 : i32
    %c0_i32_0 = arith.constant 0 : i32
    %c0_i32_1 = arith.constant 0 : i32
    return %c0_i32, %c0_i32_0 : i32, i32
  }
  func.func @transform_5(%arg0: i32) -> (i32, i32, i32) {
    %c0_i32 = arith.constant 0 : i32
    %c0_i32_0 = arith.constant 0 : i32
    %c0_i32_1 = arith.constant 0 : i32
    return %arg0, %c0_i32, %c0_i32_0 : i32, i32, i32
  }
  func.func @transform_6(%arg0: i32) -> (i32, i32, i32) {
    %c0_i32 = arith.constant 0 : i32
    %c0_i32_0 = arith.constant 0 : i32
    %c0_i32_1 = arith.constant 0 : i32
    return %arg0, %c0_i32, %c0_i32_0 : i32, i32, i32
  }
  func.func @transform_7(%arg0: i32) -> (i32, i32, i32) {
    %c0_i32 = arith.constant 0 : i32
    %c0_i32_0 = arith.constant 0 : i32
    %c0_i32_1 = arith.constant 0 : i32
    return %arg0, %c0_i32, %c0_i32_0 : i32, i32, i32
  }
  func.func @transform_8(%arg0: i32) -> (i32, i32, i32) {
    %c0_i32 = arith.constant 0 : i32
    %c0_i32_0 = arith.constant 0 : i32
    %c0_i32_1 = arith.constant 0 : i32
    return %arg0, %c0_i32, %c0_i32_0 : i32, i32, i32
  }
  func.func @transform_9(%arg0: i32) -> (i32, i32, i32) {
    %c0_i32 = arith.constant 0 : i32
    %c0_i32_0 = arith.constant 0 : i32
    %c0_i32_1 = arith.constant 0 : i32
    return %arg0, %c0_i32, %c0_i32_0 : i32, i32, i32
  }
  func.func @transform_10(%arg0: i32) -> (i32, i32, i32) {
    %c0_i32 = arith.constant 0 : i32
    %c0_i32_0 = arith.constant 0 : i32
    %c0_i32_1 = arith.constant 0 : i32
    return %arg0, %c0_i32, %c0_i32_0 : i32, i32, i32
  }
}

</mosaic_0001>

<llo_original>
// kernel: tpu_custom_call.1
$region0: #{tpu_custom_call.1}
  #allocation0 [shape = 'u32[]', space=smem, size = 0x4, offset = 0x4, fixed_abs, tag = 'smem constant byte address 0x4 - core index']
  #allocation1 [shape = 'u32[144,128]{1,0:T(1,128)}', space=vmem, size = 0x12000, scoped, tag = 'internal scratch']
  #allocation2 [shape = 'f32[1,1]{1,0:T(1,128)S(1)}', space=vmem, size = 0x200, scoped, tag = 'scoped memory for tpu_custom_call.1']
  %s0 = inlined_call_operand.vmem [shape: f32[2,4,3,256], index: 0, kind: input, shape index: {}]
  %s1 = inlined_call_operand.vmem [shape: f32[4,256], index: 1, kind: input, shape index: {}]
  %s2 = inlined_call_operand.vmem [shape: f32[4,256], index: 2, kind: input, shape index: {}]
  %s3 = inlined_call_operand.vmem [shape: f32[1,256], index: 3, kind: input, shape index: {}]
  %s4 = inlined_call_operand.<no memory space> [shape: f32[1,1], index: 4, kind: input, shape index: {}]
  %s5 = inlined_call_operand.vmem [shape: f32[2,1,1], index: 5, kind: input, shape index: {}]
  %s6 = inlined_call_operand.vmem [shape: f32[2,1,1], index: 6, kind: input, shape index: {}]
  %s7 = inlined_call_operand.vmem [shape: f32[2,4,1], index: 7, kind: output, shape index: {0}]
  %s8 = inlined_call_operand.vmem [shape: f32[2,4,1], index: 8, kind: output, shape index: {1}]
  %s9 = inlined_call_operand.vmem [shape: f32[2,4,1], index: 9, kind: output, shape index: {2}]
  %s10 = inlined_call_operand.vmem [shape: f32[2,4,1], index: 10, kind: output, shape index: {3}]
  %11 = xla_tuple %s7, %s8, %s9, %s10
  %s12 = sld [smem:[#allocation0]]
  $region62: #{tpu_custom_call.1} parent=0
    _
  %s14 = ssub.s32 1, %s12
  %s15 = scalar_select 0, %s14, %s12
  %v16 = vstv %s4
  %17 = vst [vmem:[#allocation2] sm:$0x1] %v16
  // Predicated region
  $region2: #{tpu_custom_call.1} parent=0 // pred_check
    _
  $region3: #{tpu_custom_call.1} parent=0 // pred_check_branch
    %19 = sbr.rel (0) target = $region5
  $region4: #{tpu_custom_call.1} parent=0 // pred_region
    _
  $region5: #{tpu_custom_call.1} parent=0 // pred_fallthru
    _
  // Predicated region
  $region6: #{tpu_custom_call.1} parent=0 // pred_check
    _
  $region7: #{tpu_custom_call.1} parent=0 // pred_check_branch
    %21 = sbr.rel (0) target = $region9
  $region8: #{tpu_custom_call.1} parent=0 // pred_region
    _
  $region9: #{tpu_custom_call.1} parent=0 // pred_fallthru
    _
  // Predicated region
  $region10: #{tpu_custom_call.1} parent=0 // pred_check
    _
  $region11: #{tpu_custom_call.1} parent=0 // pred_check_branch
    %23 = sbr.rel (0) target = $region13
  $region12: #{tpu_custom_call.1} parent=0 // pred_region
    _
  $region13: #{tpu_custom_call.1} parent=0 // pred_fallthru
    _
  // Predicated region
  $region14: #{tpu_custom_call.1} parent=0 // pred_check
    _
  $region15: #{tpu_custom_call.1} parent=0 // pred_check_branch
    %25 = sbr.rel (0) target = $region17
  $region16: #{tpu_custom_call.1} parent=0 // pred_region
    _
  $region17: #{tpu_custom_call.1} parent=0 // pred_fallthru
    _
  // Predicated region
  $region18: #{tpu_custom_call.1} parent=0 // pred_check
    _
  $region19: #{tpu_custom_call.1} parent=0 // pred_check_branch
    %27 = sbr.rel (0) target = $region21
  $region20: #{tpu_custom_call.1} parent=0 // pred_region
    _
  $region21: #{tpu_custom_call.1} parent=0 // pred_fallthru
    _
  // Predicated region
  $region22: #{tpu_custom_call.1} parent=0 // pred_check
    _
  $region23: #{tpu_custom_call.1} parent=0 // pred_check_branch
    %29 = sbr.rel (0) target = $region25
  $region24: #{tpu_custom_call.1} parent=0 // pred_region
    _
  $region25: #{tpu_custom_call.1} parent=0 // pred_fallthru
    _
  // Predicated region
  $region26: #{tpu_custom_call.1} parent=0 // pred_check
    _
  $region27: #{tpu_custom_call.1} parent=0 // pred_check_branch
    %31 = sbr.rel (0) target = $region29
  $region28: #{tpu_custom_call.1} parent=0 // pred_region
    _
  $region29: #{tpu_custom_call.1} parent=0 // pred_fallthru
    _
  %v32 = vld [vmem:[%s0] sm:$0x77]
  %v33 = vld [vmem:[%s0 + $0x8] sm:$0x77]
  %v34 = vld [vmem:[%s0 + $0x10] sm:$0x77]
  %v35 = vld [vmem:[%s0 + $0x18] sm:$0x77]
  %v36 = vld [vmem:[%s0 + $0x20] sm:$0x77]
  %v37 = vld [vmem:[%s0 + $0x28] sm:$0x77]
  %v38 = vld [vmem:[%s0 + $0x30] sm:$0x77]
  %v39 = vld [vmem:[%s0 + $0x38] sm:$0x77]
  %v48 = vcombine.high %v32, %v32
  %v49 = vcombine.high %v33, %v33
  %v50 = vcombine.high %v34, %v34
  %v51 = vcombine.high %v35, %v35
  %v52 = vcombine.high %v36, %v36
  %v53 = vcombine.high %v37, %v37
  %v54 = vcombine.high %v38, %v38
  %v55 = vcombine.high %v39, %v39
  %vm64 = vcmask 1042432
  %v65 = vsel %vm64, %v32, 0.0
  %v66 = vrot.slane %v65, 4
  %v67 = vadd.f32 %v65, %v66
  %v68 = vrot.slane %v67, 2
  %v69 = vadd.f32 %v67, %v68
  %v70 = vrot.slane %v69, 1
  %v71 = vadd.f32 %v69, %v70
  %v72 = vsel %vm64, %v48, 0.0
  %v73 = vrot.slane %v72, 4
  %v74 = vadd.f32 %v72, %v73
  %v75 = vrot.slane %v74, 2
  %v76 = vadd.f32 %v74, %v75
  %v77 = vrot.slane %v76, 1
  %v78 = vadd.f32 %v76, %v77
  %v79 = vsel %vm64, %v33, 0.0
  %v80 = vrot.slane %v79, 4
  %v81 = vadd.f32 %v79, %v80
  %v82 = vrot.slane %v81, 2
  %v83 = vadd.f32 %v81, %v82
  %v84 = vrot.slane %v83, 1
  %v85 = vadd.f32 %v83, %v84
  %v86 = vsel %vm64, %v49, 0.0
  %v87 = vrot.slane %v86, 4
  %v88 = vadd.f32 %v86, %v87
  %v89 = vrot.slane %v88, 2
  %v90 = vadd.f32 %v88, %v89
  %v91 = vrot.slane %v90, 1
  %v92 = vadd.f32 %v90, %v91
  %v93 = vsel %vm64, %v34, 0.0
  %v94 = vrot.slane %v93, 4
  %v95 = vadd.f32 %v93, %v94
  %v96 = vrot.slane %v95, 2
  %v97 = vadd.f32 %v95, %v96
  %v98 = vrot.slane %v97, 1
  %v99 = vadd.f32 %v97, %v98
  %v100 = vsel %vm64, %v50, 0.0
  %v101 = vrot.slane %v100, 4
  %v102 = vadd.f32 %v100, %v101
  %v103 = vrot.slane %v102, 2
  %v104 = vadd.f32 %v102, %v103
  %v105 = vrot.slane %v104, 1
  %v106 = vadd.f32 %v104, %v105
  %v107 = vsel %vm64, %v35, 0.0
  %v108 = vrot.slane %v107, 4
  %v109 = vadd.f32 %v107, %v108
  %v110 = vrot.slane %v109, 2
  %v111 = vadd.f32 %v109, %v110
  %v112 = vrot.slane %v111, 1
  %v113 = vadd.f32 %v111, %v112
  %v114 = vsel %vm64, %v51, 0.0
  %v115 = vrot.slane %v114, 4
  %v116 = vadd.f32 %v114, %v115
  %v117 = vrot.slane %v116, 2
  %v118 = vadd.f32 %v116, %v117
  %v119 = vrot.slane %v118, 1
  %v120 = vadd.f32 %v118, %v119
  %v121 = vsel %vm64, %v36, 0.0
  %v122 = vrot.slane %v121, 4
  %v123 = vadd.f32 %v121, %v122
  %v124 = vrot.slane %v123, 2
  %v125 = vadd.f32 %v123, %v124
  %v126 = vrot.slane %v125, 1
  %v127 = vadd.f32 %v125, %v126
  %v128 = vsel %vm64, %v52, 0.0
  %v129 = vrot.slane %v128, 4
  %v130 = vadd.f32 %v128, %v129
  %v131 = vrot.slane %v130, 2
  %v132 = vadd.f32 %v130, %v131
  %v133 = vrot.slane %v132, 1
  %v134 = vadd.f32 %v132, %v133
  %v135 = vsel %vm64, %v37, 0.0
  %v136 = vrot.slane %v135, 4
  %v137 = vadd.f32 %v135, %v136
  %v138 = vrot.slane %v137, 2
  %v139 = vadd.f32 %v137, %v138
  %v140 = vrot.slane %v139, 1
  %v141 = vadd.f32 %v139, %v140
  %v142 = vsel %vm64, %v53, 0.0
  %v143 = vrot.slane %v142, 4
  %v144 = vadd.f32 %v142, %v143
  %v145 = vrot.slane %v144, 2
  %v146 = vadd.f32 %v144, %v145
  %v147 = vrot.slane %v146, 1
  %v148 = vadd.f32 %v146, %v147
  %v149 = vsel %vm64, %v38, 0.0
  %v150 = vrot.slane %v149, 4
  %v151 = vadd.f32 %v149, %v150
  %v152 = vrot.slane %v151, 2
  %v153 = vadd.f32 %v151, %v152
  %v154 = vrot.slane %v153, 1
  %v155 = vadd.f32 %v153, %v154
  %v156 = vsel %vm64, %v54, 0.0
  %v157 = vrot.slane %v156, 4
  %v158 = vadd.f32 %v156, %v157
  %v159 = vrot.slane %v158, 2
  %v160 = vadd.f32 %v158, %v159
  %v161 = vrot.slane %v160, 1
  %v162 = vadd.f32 %v160, %v161
  %v163 = vsel %vm64, %v39, 0.0
  %v164 = vrot.slane %v163, 4
  %v165 = vadd.f32 %v163, %v164
  %v166 = vrot.slane %v165, 2
  %v167 = vadd.f32 %v165, %v166
  %v168 = vrot.slane %v167, 1
  %v169 = vadd.f32 %v167, %v168
  %v170 = vsel %vm64, %v55, 0.0
  %v171 = vrot.slane %v170, 4
  %v172 = vadd.f32 %v170, %v171
  %v173 = vrot.slane %v172, 2
  %v174 = vadd.f32 %v172, %v173
  %v175 = vrot.slane %v174, 1
  %v176 = vadd.f32 %v174, %v175
  %v177 = vmul.f32 %v71, 0.33333334
  %v178 = vmul.f32 %v78, 0.33333334
  %v179 = vmul.f32 %v85, 0.33333334
  %v180 = vmul.f32 %v92, 0.33333334
  %v181 = vmul.f32 %v99, 0.33333334
  %v182 = vmul.f32 %v106, 0.33333334
  %v183 = vmul.f32 %v113, 0.33333334
  %v184 = vmul.f32 %v120, 0.33333334
  %v185 = vmul.f32 %v127, 0.33333334
  %v186 = vmul.f32 %v134, 0.33333334
  %v187 = vmul.f32 %v141, 0.33333334
  %v188 = vmul.f32 %v148, 0.33333334
  %v189 = vmul.f32 %v155, 0.33333334
  %v190 = vmul.f32 %v162, 0.33333334
  %v191 = vmul.f32 %v169, 0.33333334
  %v192 = vmul.f32 %v176, 0.33333334
  %v193 = vld [vmem:[%s3] sm:$0x3]
  %v194 = vld [vmem:[#allocation2] sm:$0x1]
  %s195 = vtos %v194
  %v197 = vlaneseq
  %v198 = vshrl.u32 %v197, 7
  %v199 = vsub.s32 0, %v198
  %v200 = vrot.slane %v193, %v199
  %v201 = vlaneseq
  %v202 = vshrl.u32 %v201, 7
  %v203 = vsub.s32 1, %v202
  %v204 = vrot.slane %v193, %v203
  %v207 = vmul.f32 %v177, %v200
  %v208 = vmul.f32 %v178, %v204
  %v209 = vmul.f32 %v179, %v200
  %v210 = vmul.f32 %v180, %v204
  %v211 = vmul.f32 %v181, %v200
  %v212 = vmul.f32 %v182, %v204
  %v213 = vmul.f32 %v183, %v200
  %v214 = vmul.f32 %v184, %v204
  %v215 = vmul.f32 %v185, %v200
  %v216 = vmul.f32 %v186, %v204
  %v217 = vmul.f32 %v187, %v200
  %v218 = vmul.f32 %v188, %v204
  %v219 = vmul.f32 %v189, %v200
  %v220 = vmul.f32 %v190, %v204
  %v221 = vmul.f32 %v191, %v200
  %v222 = vmul.f32 %v192, %v204
  %v239 = vrot.slane %v209, 7
  %vm240 = vcmask 1041409
  %v241 = vsel %vm240, %v239, %v207
  %v242 = vrot.slane %v211, 6
  %vm243 = vcmask 1042434
  %v244 = vsel %vm243, %v242, %v241
  %v245 = vrot.slane %v213, 5
  %vm246 = vcmask 1043459
  %v247 = vsel %vm246, %v245, %v244
  %v248 = vrot.slane %v210, 7
  %v249 = vsel %vm240, %v248, %v208
  %v250 = vrot.slane %v212, 6
  %v251 = vsel %vm243, %v250, %v249
  %v252 = vrot.slane %v214, 5
  %v253 = vsel %vm246, %v252, %v251
  %v254 = vrot.slane %v217, 7
  %v255 = vsel %vm240, %v254, %v215
  %v256 = vrot.slane %v219, 6
  %v257 = vsel %vm243, %v256, %v255
  %v258 = vrot.slane %v221, 5
  %v259 = vsel %vm246, %v258, %v257
  %v260 = vrot.slane %v218, 7
  %v261 = vsel %vm240, %v260, %v216
  %v262 = vrot.slane %v220, 6
  %v263 = vsel %vm243, %v262, %v261
  %v264 = vrot.slane %v222, 5
  %v265 = vsel %vm246, %v264, %v263
  %vm270 = vcmask 1043456
  %v271 = vsel %vm270, %v247, 0.0
  %v272 = vsel %vm270, %v253, 0.0
  %v273 = vadd.f32 %v271, %v272
  %274 = vadd.xlane.f32.xlu0 %v273
  %v275 = vpop.xlane.xlu0 %274
  %v276 = vsel %vm270, %v259, 0.0
  %v277 = vsel %vm270, %v265, 0.0
  %v278 = vadd.f32 %v276, %v277
  %279 = vadd.xlane.f32.xlu0 %v278
  %v280 = vpop.xlane.xlu0 %279
  %v281 = vstv %s195
  %v282 = vadd.f32 %v275, %v281
  %v283 = vadd.f32 %v280, %v281
  %v284 = vld [vmem:[%s1] sm:$0xff]
  %v285 = vcombine.low %v200, %v204
  %v287 = vmul.f32 %v284, %v285
  %v289 = vcombine.high %v287, %v287
  %v291 = vsel %vm270, %v287, 0.0
  %v292 = vsel %vm270, %v289, 0.0
  %v293 = vadd.f32 %v291, %v292
  %294 = vadd.xlane.f32.xlu0 %v293
  %v295 = vpop.xlane.xlu0 %294
  %v296 = vadd.f32 %v295, %v281
  %v297 = vld [vmem:[%s2] sm:$0xff]
  %v298 = vmul.f32 %v297, %v285
  %v300 = vcombine.high %v298, %v298
  %v302 = vsel %vm270, %v298, 0.0
  %v303 = vsel %vm270, %v300, 0.0
  %v304 = vadd.f32 %v302, %v303
  %305 = vadd.xlane.f32.xlu0 %v304
  %v306 = vpop.xlane.xlu0 %305
  %v307 = vadd.f32 %v306, %v281
  %v308 = vsub.f32 %v296, %v282
  %v309 = vsub.f32 %v296, %v283
  %v310 = vand.u32 2147483647, %v308
  %v311 = vand.u32 2147483647, %v309
  %v312 = vtanh.pop %v310
  %v313 = vtanh.pop %v311
  %v314 = vsub.f32 %v307, %v282
  %v315 = vsub.f32 %v307, %v283
  %v316 = vand.u32 2147483647, %v314
  %v317 = vand.u32 2147483647, %v315
  %v318 = vtanh.pop %v316
  %v319 = vtanh.pop %v317
  %v320 = vld [vmem:[%s5] sm:$0x1]
  %v321 = vld [vmem:[%s5 + $0x1] sm:$0x1]
  %v322 = vld [vmem:[%s6] sm:$0x1]
  %v323 = vld [vmem:[%s6 + $0x1] sm:$0x1]
  %v324 = vmul.f32 %v320, %v322
  %v325 = vmul.f32 %v321, %v323
  %vm326 = vcmask 3072
  %327 = vst.msk [vmem:[%s7] sm:$0xf] %vm326, %v312
  %328 = vst.msk [vmem:[%s7 + $0x4] sm:$0xf] %vm326, %v313
  %329 = vst.msk [vmem:[%s8] sm:$0xf] %vm326, %v318
  %330 = vst.msk [vmem:[%s8 + $0x4] sm:$0xf] %vm326, %v319
  %v331 = vsub.f32 1.0, %v312
  %v332 = vsub.f32 1.0, %v313
  %v335 = vlaneseq
  %v336 = vshrl.u32 %v335, 7
  %v337 = vsub.s32 0, %v336
  %v338 = vrot.slane %v324, %v337
  %v339 = vlaneseq
  %v340 = vshrl.u32 %v339, 7
  %v341 = vsub.s32 0, %v340
  %v342 = vrot.slane %v325, %v341
  %v345 = vmul.f32 %v338, %v331
  %v346 = vmul.f32 %v342, %v332
  %347 = vst.msk [vmem:[%s9] sm:$0xf] %vm326, %v345
  %348 = vst.msk [vmem:[%s9 + $0x4] sm:$0xf] %vm326, %v346
  %v349 = vsub.f32 1.0, %v318
  %v350 = vsub.f32 1.0, %v319
  %v351 = vmul.f32 %v338, %v349
  %v352 = vmul.f32 %v342, %v350
  %353 = vst.msk [vmem:[%s10] sm:$0xf] %vm326, %v351
  %354 = vst.msk [vmem:[%s10 + $0x4] sm:$0xf] %vm326, %v352
  // Predicated region
  $region30: #{tpu_custom_call.1} parent=0 // pred_check
    _
  $region31: #{tpu_custom_call.1} parent=0 // pred_check_branch
    %356 = sbr.rel (0) target = $region33
  $region32: #{tpu_custom_call.1} parent=0 // pred_region
    _
  $region33: #{tpu_custom_call.1} parent=0 // pred_fallthru
    _
  // Predicated region
  $region34: #{tpu_custom_call.1} parent=0 // pred_check
    _
  $region35: #{tpu_custom_call.1} parent=0 // pred_check_branch
    %358 = sbr.rel (0) target = $region37
  $region36: #{tpu_custom_call.1} parent=0 // pred_region
    _
  $region37: #{tpu_custom_call.1} parent=0 // pred_fallthru
    _
  // Predicated region
  $region38: #{tpu_custom_call.1} parent=0 // pred_check
    _
  $region39: #{tpu_custom_call.1} parent=0 // pred_check_branch
    %360 = sbr.rel (0) target = $region41
  $region40: #{tpu_custom_call.1} parent=0 // pred_region
    _
  $region41: #{tpu_custom_call.1} parent=0 // pred_fallthru
    _
  // Predicated region
  $region42: #{tpu_custom_call.1} parent=0 // pred_check
    _
  $region43: #{tpu_custom_call.1} parent=0 // pred_check_branch
    %362 = sbr.rel (0) target = $region45
  $region44: #{tpu_custom_call.1} parent=0 // pred_region
    _
  $region45: #{tpu_custom_call.1} parent=0 // pred_fallthru
    _
  // Predicated region
  $region46: #{tpu_custom_call.1} parent=0 // pred_check
    _
  $region47: #{tpu_custom_call.1} parent=0 // pred_check_branch
    %364 = sbr.rel (0) target = $region49
  $region48: #{tpu_custom_call.1} parent=0 // pred_region
    _
  $region49: #{tpu_custom_call.1} parent=0 // pred_fallthru
    _
  // Predicated region
  $region50: #{tpu_custom_call.1} parent=0 // pred_check
    _
  $region51: #{tpu_custom_call.1} parent=0 // pred_check_branch
    %366 = sbr.rel (0) target = $region53
  $region52: #{tpu_custom_call.1} parent=0 // pred_region
    _
  $region53: #{tpu_custom_call.1} parent=0 // pred_fallthru
    _
  // Predicated region
  $region54: #{tpu_custom_call.1} parent=0 // pred_check
    _
  $region55: #{tpu_custom_call.1} parent=0 // pred_check_branch
    %368 = sbr.rel (0) target = $region57
  $region56: #{tpu_custom_call.1} parent=0 // pred_region
    _
  $region57: #{tpu_custom_call.1} parent=0 // pred_fallthru
    _
  // Predicated region
  $region58: #{tpu_custom_call.1} parent=0 // pred_check
    _
  $region59: #{tpu_custom_call.1} parent=0 // pred_check_branch
    %370 = sbr.rel (0) target = $region61
  $region60: #{tpu_custom_call.1} parent=0 // pred_region
    _
  $region61: #{tpu_custom_call.1} parent=0 // pred_fallthru
    _

</llo_original>
